<compile_context>
chip_gen: v7x
topology: tpu7x:2x2x1
jax: 0.10.0
libtpu: 0.0.40
codegen_flags: <defaults>
</compile_context>

<pallas_src>
import functools
import math

import jax
import jax.numpy as jnp
from jax import lax
from jax.experimental import pallas as pl
from jax.experimental.pallas import tpu as pltpu


# ---------------------------------------------------------------------------
# Pass 1: fused QKV projection  (3, B*T, C) @ (3, C, H) + (3, 1, H)
# ---------------------------------------------------------------------------
def _proj_kernel(x_ref, w_ref, b_ref, o_ref):
    # x: (tm, C), w: (C, H), b: (1, H)  ->  o: (tm, H)
    o_ref[...] = (
        jnp.dot(x_ref[...], w_ref[...], preferred_element_type=jnp.float32)
        + b_ref[...]
    ).astype(o_ref.dtype)


def _pick_tile(n, preferred=(256, 128)):
    for t in preferred:
        if n >= t and n % t == 0:
            return t
    return n


def _project_qkv(q, k, v, wq, bq, wk, bk, wv, bv):
    B, T, C = q.shape
    H = wq.shape[1]
    BT = B * T

    # Fold the 1/sqrt(H) attention scale into the query projection (weight prep).
    scale = 1.0 / math.sqrt(H)
    W = jnp.stack([wq * scale, wk, wv])                                   # (3, C, H)
    Bb = jnp.stack([bq * scale, bk, bv])                                  # (3, 1, H)
    X = jnp.stack([q.reshape(BT, C), k.reshape(BT, C), v.reshape(BT, C)])  # (3, BT, C)

    tm = _pick_tile(BT)
    assert BT % tm == 0  # TODO(synk): pad/mask ragged row tiles for arbitrary B*T

    proj = pl.pallas_call(
        _proj_kernel,
        out_shape=jax.ShapeDtypeStruct((3, BT, H), jnp.float32),
        grid_spec=pltpu.PrefetchScalarGridSpec(
            num_scalar_prefetch=0,
            grid=(3, BT // tm),
            in_specs=[
                pl.BlockSpec((pl.Squeezed(), tm, C), lambda p, r: (p, r, 0)),
                pl.BlockSpec((pl.Squeezed(), C, H), lambda p, r: (p, 0, 0)),
                pl.BlockSpec((pl.Squeezed(), 1, H), lambda p, r: (p, 0, 0)),
            ],
            out_specs=pl.BlockSpec((pl.Squeezed(), tm, H), lambda p, r: (p, r, 0)),
        ),
        compiler_params=pltpu.CompilerParams(
            dimension_semantics=("parallel", "parallel"),
            vmem_limit_bytes=64 * 1024 * 1024,
        ),
    )(X, W, Bb)
    return proj.reshape(3, B, T, H)


# ---------------------------------------------------------------------------
# Pass 2: flash-style attention with online softmax.
# ---------------------------------------------------------------------------
def _flash_attn_kernel(q_ref, k_ref, v_ref, o_ref, m_sc, l_sc, acc_sc):
    ki = pl.program_id(2)

    @pl.when(ki == 0)
    def _init():
        m_sc[...] = jnp.full_like(m_sc, -jnp.inf)
        l_sc[...] = jnp.zeros_like(l_sc)
        acc_sc[...] = jnp.zeros_like(acc_sc)

    # scores (tq, tk): contract last dims of q and k directly (no key.T materialized).
    s = lax.dot_general(
        q_ref[...], k_ref[...],
        dimension_numbers=(((1,), (1,)), ((), ())),
        preferred_element_type=jnp.float32,
    )

    m_prev = m_sc[...]
    m_new = jnp.maximum(m_prev, jnp.max(s, axis=-1, keepdims=True))
    alpha = jnp.exp(m_prev - m_new)
    p = jnp.exp(s - m_new)
    l_sc[...] = alpha * l_sc[...] + jnp.sum(p, axis=-1, keepdims=True)
    acc_sc[...] = alpha * acc_sc[...] + jnp.dot(
        p, v_ref[...], preferred_element_type=jnp.float32
    )
    m_sc[...] = m_new

    @pl.when(ki == pl.num_programs(2) - 1)
    def _finalize():
        # (tq,1) reciprocal + broadcast multiply instead of (tq,tk)-style divides.
        inv_l = pl.reciprocal(l_sc[...], approx=False)
        # NOTE: for production H should be a multiple of 128 so this store is
        # lane-dense (unmasked vst); the small demo H=32 uses masked stores.
        o_ref[...] = (acc_sc[...] * inv_l).astype(o_ref.dtype)


def t_att_pallas(q, k, v, wq, bq, wk, bk, wv, bv, *, tq=None, tk=None):
    """q,k,v: (B,T,C); wX: (C,H) (transposed from torch's (H,C)); bX: (1,H)."""
    B, T, C = q.shape
    H = wq.shape[1]

    proj = _project_qkv(q, k, v, wq, bq, wk, bk, wv, bv)  # (3, B, T, H)

    # 128-sized tiles: MXU-matched on v5e, bounded live state (tq*tk + tq*H f32)
    # regardless of T, well inside v7x's 64 MiB VMEM.
    if tq is None:
        tq = _pick_tile(T, preferred=(128,))
    if tk is None:
        tk = _pick_tile(T, preferred=(128,))
    assert T % tq == 0 and T % tk == 0  # TODO(synk): pad/mask ragged T tiles

    grid = (B, T // tq, T // tk)

    return pl.pallas_call(
        _flash_attn_kernel,
        out_shape=jax.ShapeDtypeStruct((B, T, H), jnp.float32),
        grid_spec=pltpu.PrefetchScalarGridSpec(
            num_scalar_prefetch=0,
            grid=grid,
            in_specs=[
                # projected query / key / value tiles sliced out of the stacked
                # (3, B, T, H) projection output (same array passed three times).
                pl.BlockSpec((pl.Squeezed(), pl.Squeezed(), tq, H),
                             lambda b, qi, ki: (0, b, qi, 0)),
                pl.BlockSpec((pl.Squeezed(), pl.Squeezed(), tk, H),
                             lambda b, qi, ki: (1, b, ki, 0)),
                pl.BlockSpec((pl.Squeezed(), pl.Squeezed(), tk, H),
                             lambda b, qi, ki: (2, b, ki, 0)),
            ],
            out_specs=pl.BlockSpec((pl.Squeezed(), tq, H),
                                   lambda b, qi, ki: (b, qi, 0)),
            scratch_shapes=[
                pltpu.VMEM((tq, 1), jnp.float32),   # running max m
                pltpu.VMEM((tq, 1), jnp.float32),   # running denom l
                pltpu.VMEM((tq, H), jnp.float32),   # output accumulator
            ],
        ),
        compiler_params=pltpu.CompilerParams(
            dimension_semantics=("parallel", "parallel", "arbitrary"),
            vmem_limit_bytes=64 * 1024 * 1024,
        ),
    )(proj, proj, proj)


def t_att_reference(q, k, v, wq, bq, wk, bk, wv, bv):
    """Pure-JAX reference (mirrors the PyTorch forward)."""
    H = wq.shape[1]
    query = q @ wq + bq
    key = k @ wk + bk
    value = v @ wv + bv
    energy = jnp.einsum('btf,byf->bty', query, key) / math.sqrt(H)
    attn = jax.nn.softmax(energy, axis=-1)
    return jnp.einsum('btf,bfy->bty', attn, value)


if __name__ == "__main__":
    # Small shapes consistent with the module: batch=2, seq(T)=8,
    # in_channel=16, hidden_channel=32.
    B, T, C, H = 2, 8, 16, 32

    key0 = jax.random.PRNGKey(0)
    ks = jax.random.split(key0, 9)

    q = jax.random.normal(ks[0], (B, T, C), dtype=jnp.float32)
    k = jax.random.normal(ks[1], (B, T, C), dtype=jnp.float32)
    v = jax.random.normal(ks[2], (B, T, C), dtype=jnp.float32)

    # nn.Linear weights are (out, in); store transposed (in, out) for the kernel.
    bound = 1.0 / math.sqrt(C)
    wq = jax.random.uniform(ks[3], (C, H), minval=-bound, maxval=bound, dtype=jnp.float32)
    wk = jax.random.uniform(ks[4], (C, H), minval=-bound, maxval=bound, dtype=jnp.float32)
    wv = jax.random.uniform(ks[5], (C, H), minval=-bound, maxval=bound, dtype=jnp.float32)
    bq = jax.random.uniform(ks[6], (1, H), minval=-bound, maxval=bound, dtype=jnp.float32)
    bk = jax.random.uniform(ks[7], (1, H), minval=-bound, maxval=bound, dtype=jnp.float32)
    bv = jax.random.uniform(ks[8], (1, H), minval=-bound, maxval=bound, dtype=jnp.float32)

    out = t_att_pallas(q, k, v, wq, bq, wk, bk, wv, bv)
    out = jax.block_until_ready(out)

    ref = t_att_reference(q, k, v, wq, bq, wk, bk, wv, bv)
    assert out.shape == (B, T, H)
    assert jnp.allclose(out, ref, atol=1e-4, rtol=1e-4), "mismatch vs JAX reference"

    print("KERNEL_OK")
</pallas_src>

<mosaic_0001>
module attributes {stable_mosaic.version = 11 : i64} {
  func.func @_proj_kernel(%arg0: i32, %arg1: i32, %arg2: memref<1x16x16xf32, #tpu.memory_space<vmem>>, %arg3: memref<1x16x32xf32, #tpu.memory_space<vmem>>, %arg4: memref<1x1x32xf32, #tpu.memory_space<vmem>>, %arg5: memref<1x16x32xf32, #tpu.memory_space<vmem>>) attributes {dimension_semantics = [#tpu.dimension_semantics<parallel>, #tpu.dimension_semantics<parallel>], iteration_bounds = array<i64: 3, 1>, scalar_prefetch = 0 : i64, scratch_operands = 0 : i64, tpu.core_type = #tpu.core_type<tc>, window_params = [{transform_indices = @transform_0, window_bounds = array<i64: 1, 16, 16>}, {transform_indices = @transform_1, window_bounds = array<i64: 1, 16, 32>}, {transform_indices = @transform_2, window_bounds = array<i64: 1, 1, 32>}, {transform_indices = @transform_3, window_bounds = array<i64: 1, 16, 32>}]} {
    %c0 = arith.constant 0 : index
    %c0_0 = arith.constant 0 : index
    %c0_1 = arith.constant 0 : index
    %0 = vector.load %arg2[%c0, %c0_0, %c0_1] : memref<1x16x16xf32, #tpu.memory_space<vmem>>, vector<1x16x16xf32>
    %1 = vector.shape_cast %0 : vector<1x16x16xf32> to vector<16x16xf32>
    %c0_2 = arith.constant 0 : index
    %c0_3 = arith.constant 0 : index
    %c0_4 = arith.constant 0 : index
    %2 = vector.load %arg3[%c0_2, %c0_3, %c0_4] : memref<1x16x32xf32, #tpu.memory_space<vmem>>, vector<1x16x32xf32>
    %3 = vector.shape_cast %2 : vector<1x16x32xf32> to vector<16x32xf32>
    %cst = arith.constant dense<0.000000e+00> : vector<16x32xf32>
    %4 = tpu.matmul %1, %3, %cst {dimension_numbers = #tpu.dot_dimension_numbers<[1], [0], [0], [1], [0, 0, 1, 1], [], []>} : vector<16x16xf32>, vector<16x32xf32>, vector<16x32xf32> -> vector<16x32xf32>
    %c0_5 = arith.constant 0 : index
    %c0_6 = arith.constant 0 : index
    %c0_7 = arith.constant 0 : index
    %5 = vector.load %arg4[%c0_5, %c0_6, %c0_7] : memref<1x1x32xf32, #tpu.memory_space<vmem>>, vector<1x1x32xf32>
    %6 = vector.shape_cast %5 : vector<1x1x32xf32> to vector<1x32xf32>
    %7 = vector.broadcast %6 : vector<1x32xf32> to vector<16x32xf32>
    %8 = arith.addf %4, %7 : vector<16x32xf32>
    %c0_8 = arith.constant 0 : index
    %c0_9 = arith.constant 0 : index
    %c0_10 = arith.constant 0 : index
    %9 = vector.load %arg5[%c0_8, %c0_9, %c0_10] : memref<1x16x32xf32, #tpu.memory_space<vmem>>, vector<1x16x32xf32>
    %10 = vector.shape_cast %9 : vector<1x16x32xf32> to vector<16x32xf32>
    %11 = vector.shape_cast %8 : vector<16x32xf32> to vector<1x16x32xf32>
    tpu.vector_store %arg5[%c0_8, %c0_9, %c0_10], %11 {strides = array<i32>} : memref<1x16x32xf32, #tpu.memory_space<vmem>>, vector<1x16x32xf32>,
    return
  }
  func.func @transform_0(%arg0: i32, %arg1: i32) -> (i32, i32, i32) {
    %c0_i32 = arith.constant 0 : i32
    %c0_i32_0 = arith.constant 0 : i32
    return %arg0, %arg1, %c0_i32 : i32, i32, i32
  }
  func.func @transform_1(%arg0: i32, %arg1: i32) -> (i32, i32, i32) {
    %c0_i32 = arith.constant 0 : i32
    %c0_i32_0 = arith.constant 0 : i32
    %c0_i32_1 = arith.constant 0 : i32
    return %arg0, %c0_i32, %c0_i32_0 : i32, i32, i32
  }
  func.func @transform_2(%arg0: i32, %arg1: i32) -> (i32, i32, i32) {
    %c0_i32 = arith.constant 0 : i32
    %c0_i32_0 = arith.constant 0 : i32
    %c0_i32_1 = arith.constant 0 : i32
    return %arg0, %c0_i32, %c0_i32_0 : i32, i32, i32
  }
  func.func @transform_3(%arg0: i32, %arg1: i32) -> (i32, i32, i32) {
    %c0_i32 = arith.constant 0 : i32
    %c0_i32_0 = arith.constant 0 : i32
    return %arg0, %arg1, %c0_i32 : i32, i32, i32
  }
}

</mosaic_0001>

<llo_original>
// kernel: tpu_custom_call.1
$region0: #{tpu_custom_call.1}
  #allocation0 [shape = 'u32[]', space=smem, size = 0x4, offset = 0x4, fixed_abs, tag = 'smem constant byte address 0x4 - core index']
  #allocation1 [shape = 'u32[144,128]{1,0:T(1,128)}', space=vmem, size = 0x12000, scoped, tag = 'internal scratch']
  %s0 = inlined_call_operand.hbm [shape: f32[3,16,16], index: 0, kind: input, shape index: {}]
  %s1 = inlined_call_operand.hbm [shape: f32[3,16,32], index: 1, kind: input, shape index: {}]
  %s2 = inlined_call_operand.hbm [shape: f32[3,1,32], index: 2, kind: input, shape index: {}]
  %s3 = inlined_call_operand.hbm [shape: f32[3,16,32], index: 3, kind: output, shape index: {}]
  %s4 = sld [smem:[#allocation0]]
  $region57: #{tpu_custom_call.1} parent=0
    _
  %s6 = ssub.s32 1, %s4
  %s7 = scalar_select 0, %s6, %s4
  $region1: #{tpu_custom_call.1} parent=0
    #allocation2 [shape = 'u8[16384]{0}', space=vmem, size = 0x4000, scoped, tag = 'input window, operand 0']
    #allocation3 [shape = 's32[2]{0}', space=sflag, size = 0x8, scoped, tag = 'scoped memory for tpu_custom_call.1']
    #allocation4 [shape = 's32[2]{0}', space=sflag, size = 0x8, scoped, tag = 'scoped memory for tpu_custom_call.1']
    #allocation5 [shape = 'u8[16384]{0}', space=vmem, size = 0x4000, scoped, tag = 'input window, operand 1']
    #allocation6 [shape = 's32[2]{0}', space=sflag, size = 0x8, scoped, tag = 'scoped memory for tpu_custom_call.1']
    #allocation7 [shape = 'u8[1024]{0}', space=vmem, size = 0x400, scoped, tag = 'input window, operand 2']
    #allocation8 [shape = 'u8[16384]{0}', space=vmem, size = 0x4000, scoped, tag = 'output window, operand 0']
    %8 = vsyncpa [#allocation3], 0
    %s9 = scalar_lea.sflag [#allocation3], 1
    %10 = vsyncpa %s9, 0
    %11 = vsyncpa [#allocation6], 0
    %s12 = scalar_lea.sflag [#allocation6], 1
    %13 = vsyncpa %s12, 0
    %14 = vsyncpa [#allocation4], 0
    %s15 = scalar_lea.sflag [#allocation4], 1
    %16 = vsyncpa %s15, 0
    loop: start=0, step=1, limit=5
    $region2: #{tpu_custom_call.1} parent=1 // loop_pre_header
      _
    $region3: #{tpu_custom_call.1} parent=1 // loop_header
      %s18 = sphi 0, %s22
      %p19 = scmp.ge.s32.totalorder %s18, 5
      %s25 = sphi 0, %s37
      %s26 = sphi 0, %s33
      %s27 = sphi 0, %s25
      %s28 = sphi 0, %s26
      %s29 = sphi 0, %s27
      %s30 = sphi 0, %s28
      %s42 = sphi 0, %s44
      %s45 = sphi 0, %s42
      %s46 = sphi 0, %s45
      %s62 = sphi 0, %s46
      %s68 = sphi 0, %s70
      %s71 = sphi 0, %s68
      %s72 = sphi 0, %s71
      %s88 = sphi 0, %s72
      %s94 = sphi 0, %s96
      %s97 = sphi 0, %s94
      %s98 = sphi 0, %s97
      %s114 = sphi 0, %s98
      %s122 = sphi 0, %s124
      %s125 = sphi 0, %s122
      %s126 = sphi 0, %s125
      %s142 = sphi 0, %s126
    $region4: #{tpu_custom_call.1} parent=1 // loop_header_branch
      %21 = sbr.rel (%p19) target = $region8
    $region5: #{tpu_custom_call.1} parent=1 // loop_body
      %s23 = ssub.s32 %s18, 1
      %s24 = ssub.s32 %s18, 2
      %s31 = sadd.s32 1, %s26
      %p32 = scmp.ge.s32.totalorder %s31, 1
      %s33 = scalar_select %p32, 0, %s31
      %s34 = sadd.s32 1, %s25
      %s35 = scalar_select %p32, %s34, %s25
      %p36 = scmp.ge.s32.totalorder %s35, 3
      %s37 = scalar_select %p36, 0, %s35
      %s38 = ssub.s32 %s25, %s37
      %s39 = ssub.s32 %s26, %s33
      %s40 = sor.u32 %s38, %s39
      %p41 = scmp.eq.s32.totalorder %s40, 0
      %s43 = sadd.s32 %s42, 1
      %s44 = scalar_select %p41, %s42, %s43
      %p47 = pneg %p41
      %p48 = scmp.eq.s32.totalorder %s18, 2
      %p49 = por %p47, %p48
      %p50 = scmp.ne.s32.totalorder %s42, %s45
      %p51 = scmp.eq.s32.totalorder %s18, 0
      %p52 = por %p50, %p51
      %p53 = scmp.ne.s32.totalorder %s42, %s45
      %p54 = scmp.eq.s32.totalorder %s23, 2
      %p55 = por %p53, %p54
      %p56 = scmp.ne.s32.totalorder %s45, %s46
      %p57 = scmp.eq.s32.totalorder %s23, 0
      %p58 = por %p56, %p57
      %p59 = scmp.ne.s32.totalorder %s45, %s46
      %p60 = scmp.eq.s32.totalorder %s24, 2
      %p61 = por %p59, %p60
      %p63 = scmp.ne.s32.totalorder %s46, %s62
      %p64 = scmp.eq.s32.totalorder %s24, 0
      %p65 = por %p63, %p64
      %s66 = ssub.s32 %s25, %s37
      %p67 = scmp.eq.s32.totalorder %s66, 0
      %s69 = sadd.s32 %s68, 1
      %s70 = scalar_select %p67, %s68, %s69
      %p73 = pneg %p67
      %p74 = scmp.eq.s32.totalorder %s18, 2
      %p75 = por %p73, %p74
      %p76 = scmp.ne.s32.totalorder %s68, %s71
      %p77 = scmp.eq.s32.totalorder %s18, 0
      %p78 = por %p76, %p77
      %p79 = scmp.ne.s32.totalorder %s68, %s71
      %p80 = scmp.eq.s32.totalorder %s23, 2
      %p81 = por %p79, %p80
      %p82 = scmp.ne.s32.totalorder %s71, %s72
      %p83 = scmp.eq.s32.totalorder %s23, 0
      %p84 = por %p82, %p83
      %p85 = scmp.ne.s32.totalorder %s71, %s72
      %p86 = scmp.eq.s32.totalorder %s24, 2
      %p87 = por %p85, %p86
      %p89 = scmp.ne.s32.totalorder %s72, %s88
      %p90 = scmp.eq.s32.totalorder %s24, 0
      %p91 = por %p89, %p90
      %s92 = ssub.s32 %s25, %s37
      %p93 = scmp.eq.s32.totalorder %s92, 0
      %s95 = sadd.s32 %s94, 1
      %s96 = scalar_select %p93, %s94, %s95
      %p99 = pneg %p93
      %p100 = scmp.eq.s32.totalorder %s18, 2
      %p101 = por %p99, %p100
      %p102 = scmp.ne.s32.totalorder %s94, %s97
      %p103 = scmp.eq.s32.totalorder %s18, 0
      %p104 = por %p102, %p103
      %p105 = scmp.ne.s32.totalorder %s94, %s97
      %p106 = scmp.eq.s32.totalorder %s23, 2
      %p107 = por %p105, %p106
      %p108 = scmp.ne.s32.totalorder %s97, %s98
      %p109 = scmp.eq.s32.totalorder %s23, 0
      %p110 = por %p108, %p109
      %p111 = scmp.ne.s32.totalorder %s97, %s98
      %p112 = scmp.eq.s32.totalorder %s24, 2
      %p113 = por %p111, %p112
      %p115 = scmp.ne.s32.totalorder %s98, %s114
      %p116 = scmp.eq.s32.totalorder %s24, 0
      %p117 = por %p115, %p116
      %s118 = ssub.s32 %s25, %s37
      %s119 = ssub.s32 %s26, %s33
      %s120 = sor.u32 %s118, %s119
      %p121 = scmp.eq.s32.totalorder %s120, 0
      %s123 = sadd.s32 %s122, 1
      %s124 = scalar_select %p121, %s122, %s123
      %p127 = pneg %p121
      %p128 = scmp.eq.s32.totalorder %s18, 2
      %p129 = por %p127, %p128
      %p130 = scmp.ne.s32.totalorder %s122, %s125
      %p131 = scmp.eq.s32.totalorder %s18, 0
      %p132 = por %p130, %p131
      %p133 = scmp.ne.s32.totalorder %s122, %s125
      %p134 = scmp.eq.s32.totalorder %s23, 2
      %p135 = por %p133, %p134
      %p136 = scmp.ne.s32.totalorder %s125, %s126
      %p137 = scmp.eq.s32.totalorder %s23, 0
      %p138 = por %p136, %p137
      %p139 = scmp.ne.s32.totalorder %s125, %s126
      %p140 = scmp.eq.s32.totalorder %s24, 2
      %p141 = por %p139, %p140
      %p143 = scmp.ne.s32.totalorder %s126, %s142
      %p144 = scmp.eq.s32.totalorder %s24, 0
      %p145 = por %p143, %p144
      %p146 = scmp.le.s32.totalorder 1, %s18
      %p147 = scmp.lt.s32.totalorder %s18, 4
      %p148 = pnand %p146, %p147
      %p149 = pneg %p148
      // Predicated region
      $region9: #{tpu_custom_call.1} parent=5 // pred_check
        _
      $region10: #{tpu_custom_call.1} parent=5 // pred_check_branch
        %151 = sbr.rel (%p148) target = $region12
      $region11: #{tpu_custom_call.1} parent=5 // pred_region
        %s152 = ssub.s32 %s18, 1
      $region12: #{tpu_custom_call.1} parent=5 // pred_fallthru
        _
      %p153 = scmp.lt.s32.totalorder %s18, 3
      // Predicated region
      $region13: #{tpu_custom_call.1} parent=5 // pred_check
        %p154 = pneg %p153
      $region14: #{tpu_custom_call.1} parent=5 // pred_check_branch
        %156 = sbr.rel (%p154) target = $region16
      $region15: #{tpu_custom_call.1} parent=5 // pred_region
        // Predicated region
        $region17: #{tpu_custom_call.1} parent=15 // pred_check
          %p157 = pneg %p52
        $region18: #{tpu_custom_call.1} parent=15 // pred_check_branch
          %159 = sbr.rel (%p157) target = $region20
        $region19: #{tpu_custom_call.1} parent=15 // pred_region
          %s160 = sand.u32 %s42, 1
          %s161 = scalar_lea.sflag [#allocation3], %s160
          %s162 = sand.u32 %s42, 1
          %s163 = smul.addr %s162, 16
          %s164 = scalar_lea.vmem [#allocation2], %s163
          %s165 = smul.u32 2, %s26
          %s167 = ssub.s32 256, 256
          %168 = vsyncadd %s161, %s167
          %s169 = smul.addr %s25, 2
          %s170 = sadd.s32 %s165, %s169
          %s171 = smul.addr %s170, 128
          %s172 = scalar_lea.hbm %s0, %s171
          %s173 = sshll.u32 %s164, 4
          %s174 = int_to_ptr.vmem [resolvable:$true] %s173
          %179 = dma.hbm_to_vmem [thread:$0]  %s172, 256, %s174, %s161, 128, 128, 8
        $region20: #{tpu_custom_call.1} parent=15 // pred_fallthru
          _
        // Predicated region
        $region21: #{tpu_custom_call.1} parent=15 // pred_check
          %p180 = pneg %p78
        $region22: #{tpu_custom_call.1} parent=15 // pred_check_branch
          %182 = sbr.rel (%p180) target = $region24
        $region23: #{tpu_custom_call.1} parent=15 // pred_region
          %s183 = sand.u32 %s18, 1
          %s184 = scalar_lea.sflag [#allocation6], %s183
          %s185 = sand.u32 %s68, 1
          %s186 = smul.addr %s185, 16
          %s187 = scalar_lea.vmem [#allocation5], %s186
          %s189 = ssub.s32 256, 256
          %190 = vsyncadd %s184, %s189
          %s191 = smul.addr %s25, 2
          %s192 = smul.addr %s191, 128
          %s193 = scalar_lea.hbm %s1, %s192
          %s194 = sshll.u32 %s187, 4
          %s195 = int_to_ptr.vmem [resolvable:$true] %s194
          %200 = dma.hbm_to_vmem [thread:$0]  %s193, 256, %s195, %s184, 128, 128, 8
        $region24: #{tpu_custom_call.1} parent=15 // pred_fallthru
          _
        // Predicated region
        $region25: #{tpu_custom_call.1} parent=15 // pred_check
          %p201 = pneg %p104
        $region26: #{tpu_custom_call.1} parent=15 // pred_check_branch
          %203 = sbr.rel (%p201) target = $region28
        $region27: #{tpu_custom_call.1} parent=15 // pred_region
          %s204 = sand.u32 %s18, 1
          %s205 = scalar_lea.sflag [#allocation6], %s204
          %s206 = sand.u32 %s94, 1
          %s207 = scalar_lea.vmem [#allocation7], %s206
          %s209 = ssub.s32 16, 16
          %210 = vsyncadd %s205, %s209
          %s211 = smul.addr %s25, 16
          %s212 = scalar_lea.hbm %s2, %s211
          %s214 = sshll.u32 %s207, 4
          %s215 = int_to_ptr.vmem [resolvable:$true] %s214
          %217 = dma.hbm_to_vmem [thread:$0]  %s212, 16, %s215, %s205
        $region28: #{tpu_custom_call.1} parent=15 // pred_fallthru
          _
      $region16: #{tpu_custom_call.1} parent=5 // pred_fallthru
        _
      %p218 = scmp.le.s32.totalorder 1, %s18
      %p219 = scmp.lt.s32.totalorder %s18, 4
      %p220 = pnand %p218, %p219
      %p221 = pneg %p220
      // Predicated region
      $region29: #{tpu_custom_call.1} parent=5 // pred_check
        _
      $region30: #{tpu_custom_call.1} parent=5 // pred_check_branch
        %223 = sbr.rel (%p220) target = $region32
      $region31: #{tpu_custom_call.1} parent=5 // pred_region
        %s224 = ssub.s32 %s18, 1
        %s225 = sand.u32 %s45, 1
        %s226 = scalar_lea.sflag [#allocation3], %s225
        %s227 = sand.u32 %s45, 1
        %s228 = smul.addr %s227, 16
        %s229 = scalar_lea.vmem [#allocation2], %s228
        // Predicated region
        $region33: #{tpu_custom_call.1} parent=31 // pred_check
          %p230 = pneg %p58
        $region34: #{tpu_custom_call.1} parent=31 // pred_check_branch
          %232 = sbr.rel (%p230) target = $region36
        $region35: #{tpu_custom_call.1} parent=31 // pred_region
          %233 = dma.done %s226, 256
        $region36: #{tpu_custom_call.1} parent=31 // pred_fallthru
          _
        %s234 = sand.u32 %s23, 1
        %s235 = scalar_lea.sflag [#allocation6], %s234
        %s236 = sand.u32 %s71, 1
        %s237 = smul.addr %s236, 16
        %s238 = scalar_lea.vmem [#allocation5], %s237
        // Predicated region
        $region37: #{tpu_custom_call.1} parent=31 // pred_check
          %p239 = pneg %p84
        $region38: #{tpu_custom_call.1} parent=31 // pred_check_branch
          %241 = sbr.rel (%p239) target = $region40
        $region39: #{tpu_custom_call.1} parent=31 // pred_region
          %242 = dma.done %s235, 256
        $region40: #{tpu_custom_call.1} parent=31 // pred_fallthru
          _
        %s243 = sand.u32 %s23, 1
        %s244 = scalar_lea.sflag [#allocation6], %s243
        %s245 = sand.u32 %s97, 1
        %s246 = scalar_lea.vmem [#allocation7], %s245
        // Predicated region
        $region41: #{tpu_custom_call.1} parent=31 // pred_check
          %p247 = pneg %p110
        $region42: #{tpu_custom_call.1} parent=31 // pred_check_branch
          %249 = sbr.rel (%p247) target = $region44
        $region43: #{tpu_custom_call.1} parent=31 // pred_region
          %250 = dma.done %s244, 16
        $region44: #{tpu_custom_call.1} parent=31 // pred_fallthru
          _
        %s251 = sand.u32 %s45, 1
        %s252 = scalar_lea.sflag [#allocation3], %s251
        %s253 = sand.u32 %s45, 1
        %s254 = smul.addr %s253, 16
        %s255 = scalar_lea.vmem [#allocation2], %s254
        %p256 = pneg %p58
        %p257 = pneg %p55
        %s258 = sand.u32 %s23, 1
        %s259 = scalar_lea.sflag [#allocation6], %s258
        %s260 = sand.u32 %s71, 1
        %s261 = smul.addr %s260, 16
        %s262 = scalar_lea.vmem [#allocation5], %s261
        %p263 = pneg %p84
        %p264 = pneg %p81
        %s265 = sand.u32 %s23, 1
        %s266 = scalar_lea.sflag [#allocation6], %s265
        %s267 = sand.u32 %s97, 1
        %s268 = scalar_lea.vmem [#allocation7], %s267
        %p269 = pneg %p110
        %p270 = pneg %p107
        %p271 = pneg %p138
        %p272 = pneg %p135
        %s273 = sand.u32 %s125, 1
        %s274 = scalar_lea.sflag [#allocation4], %s273
        %s275 = sand.u32 %s125, 1
        %s276 = smul.addr %s275, 16
        %s277 = scalar_lea.vmem [#allocation8], %s276
        %s278 = smul.u32 2, %s28
        %s279 = smul.u32 2, %s28
        %v280 = vld [vmem:[%s229] sm:$0xff]
        %v281 = vld [vmem:[%s229 + $0x8] sm:$0xff]
        %v282 = vld [vmem:[%s238] sm:$0xff]
        %v283 = vld [vmem:[%s238 + $0x8] sm:$0xff]
        %v284 = vld [vmem:[%s246] sm:$0x1]
        %v286 = vlaneseq
        %v287 = vshrl.u32 %v286, 7
        %v288 = vsub.s32 0, %v287
        %v289 = vrot.slane %v284, %v288
        %vm291 = vcmask 130048
        %v293 = vsel %vm291, %v280, 0
        %v296 = vsel %vm291, %v281, 0
        %298 = vmatprep.subr.mxu0 0.0
        %299 = vmatpush1.msra.mxu0 %v282
        %300 = vmatprep.subr.mxu0 0.0
        %301 = vmatpush1.msra.mxu0 %v283
        %302 = vmatprep.subr.mxu0 0.0
        %303 = vmatpush1.msra.mxu0 0.0
        %304 = vmatprep.subr.mxu0 0.0
        %305 = vmatpush1.msra.mxu0 0.0
        %306 = vmatprep.subr.mxu0 0.0
        %307 = vmatpush1.msra.mxu0 0.0
        %308 = vmatprep.subr.mxu0 0.0
        %309 = vmatpush1.msra.mxu0 0.0
        %310 = vmatprep.subr.mxu0 0.0
        %311 = vmatpush1.msra.mxu0 0.0
        %312 = vmatprep.subr.mxu0 0.0
        %313 = vmatpush1.msra.mxu0 0.0
        %314 = vmatprep.subr.mxu0 0.0
        %315 = vmatpush1.msra.mxu0 0.0
        %316 = vmatprep.subr.mxu0 0.0
        %317 = vmatpush1.msra.mxu0 0.0
        %318 = vmatprep.subr.mxu0 0.0
        %319 = vmatpush1.msra.mxu0 0.0
        %320 = vmatprep.subr.mxu0 0.0
        %321 = vmatpush1.msra.mxu0 0.0
        %322 = vmatprep.subr.mxu0 0.0
        %323 = vmatpush1.msra.mxu0 0.0
        %324 = vmatprep.subr.mxu0 0.0
        %325 = vmatpush1.msra.mxu0 0.0
        %326 = vmatprep.subr.mxu0 0.0
        %327 = vmatpush1.msra.mxu0 0.0
        %328 = vmatprep.subr.mxu0 0.0
        %329 = vmatpush1.msra.mxu0 0.0
        %330 = vmatprep.subr.mxu0 0.0
        %331 = vmatpush1.msra.mxu0 0.0
        %332 = vmatprep.subr.mxu0 0.0
        %333 = vmatpush1.msra.mxu0 0.0
        %334 = vmatprep.subr.mxu0 0.0
        %335 = vmatpush1.msra.mxu0 0.0
        %336 = vmatprep.subr.mxu0 0.0
        %337 = vmatpush1.msra.mxu0 0.0
        %338 = vmatprep.subr.mxu0 0.0
        %339 = vmatpush1.msra.mxu0 0.0
        %340 = vmatprep.subr.mxu0 0.0
        %341 = vmatpush1.msra.mxu0 0.0
        %342 = vmatprep.subr.mxu0 0.0
        %343 = vmatpush1.msra.mxu0 0.0
        %344 = vmatprep.subr.mxu0 0.0
        %345 = vmatpush1.msra.mxu0 0.0
        %346 = vmatprep.subr.mxu0 0.0
        %347 = vmatpush1.msra.mxu0 0.0
        %348 = vmatprep.subr.mxu0 0.0
        %349 = vmatpush1.msra.mxu0 0.0
        %350 = vmatprep.subr.mxu0 0.0
        %351 = vmatpush1.msra.mxu0 0.0
        %352 = vmatprep.subr.mxu0 0.0
        %353 = vmatpush1.msra.mxu0 0.0
        %354 = vmatprep.subr.mxu0 0.0
        %355 = vmatpush1.msra.mxu0 0.0
        %356 = vmatprep.subr.mxu0 0.0
        %357 = vmatpush1.msra.mxu0 0.0
        %358 = vmatprep.subr.mxu0 0.0
        %359 = vmatpush1.msra.mxu0 0.0
        %360 = vmatprep.subr.mxu0 0.0
        %361 = vmatpush1.msra.mxu0 0.0
        %362 = vmatprep.mubr.f32.mxu0 0.0
        %363 = vmatmul.mubr.f32.gmra.mrb[0].mxu0 %v293
        %v364 = vpop.f32.mrb[0].mxu0
        %v365 = vadd.f32 %v289, %v364
        %v366 = vpop.f32.mrb[0].mxu0
        %367 = vmatprep.mubr.f32.mxu0 0.0
        %368 = vmatmul.mubr.f32.gmra.mrb[0].mxu0 %v296
        %v369 = vpop.f32.mrb[0].mxu0
        %v370 = vadd.f32 %v289, %v369
        %v371 = vpop.f32.mrb[0].mxu0
        %372 = vdwg.mxu0
        %vm373 = vcmask 261120
        %374 = vst.msk [vmem:[%s277] sm:$0xff] %vm373, %v365
        %375 = vst.msk [vmem:[%s277 + $0x8] sm:$0xff] %vm373, %v370
        %s376 = sand.u32 %s125, 1
        %s377 = scalar_lea.sflag [#allocation4], %s376
        %s378 = sand.u32 %s125, 1
        %s379 = smul.addr %s378, 16
        %s380 = scalar_lea.vmem [#allocation8], %s379
        // Predicated region
        $region45: #{tpu_custom_call.1} parent=31 // pred_check
          %p381 = pneg %p135
        $region46: #{tpu_custom_call.1} parent=31 // pred_check_branch
          %383 = sbr.rel (%p381) target = $region48
        $region47: #{tpu_custom_call.1} parent=31 // pred_region
          %s384 = smul.u32 2, %s28
          %s386 = ssub.s32 256, 256
          %387 = vsyncadd %s377, %s386
          %s388 = smul.addr %s27, 2
          %s389 = sadd.s32 %s384, %s388
          %s390 = smul.addr %s389, 128
          %s391 = scalar_lea.hbm %s3, %s390
          %s392 = sshll.u32 %s380, 4
          %s393 = int_to_ptr.vmem [resolvable:$true] %s392
          %398 = dma.vmem_to_hbm [thread:$0]  %s393, 256, %s391, %s377, 128, 128, 8
        $region48: #{tpu_custom_call.1} parent=31 // pred_fallthru
          _
      $region32: #{tpu_custom_call.1} parent=5 // pred_fallthru
        _
      %p399 = scmp.le.s32.totalorder 2, %s18
      // Predicated region
      $region49: #{tpu_custom_call.1} parent=5 // pred_check
        %p400 = pneg %p399
      $region50: #{tpu_custom_call.1} parent=5 // pred_check_branch
        %402 = sbr.rel (%p400) target = $region52
      $region51: #{tpu_custom_call.1} parent=5 // pred_region
        %s403 = ssub.s32 %s18, 2
        // Predicated region
        $region53: #{tpu_custom_call.1} parent=51 // pred_check
          %p404 = pneg %p141
        $region54: #{tpu_custom_call.1} parent=51 // pred_check_branch
          %406 = sbr.rel (%p404) target = $region56
        $region55: #{tpu_custom_call.1} parent=51 // pred_region
          %s407 = sand.u32 %s126, 1
          %s408 = scalar_lea.sflag [#allocation4], %s407
          %s409 = sand.u32 %s126, 1
          %s410 = smul.addr %s409, 16
          %s411 = scalar_lea.vmem [#allocation8], %s410
          %412 = dma.done %s408, 256
        $region56: #{tpu_custom_call.1} parent=51 // pred_fallthru
          _
      $region52: #{tpu_custom_call.1} parent=5 // pred_fallthru
        _
    $region6: #{tpu_custom_call.1} parent=1 // loop_footer
      %s22 = sadd.s32 1, %s18
    $region7: #{tpu_custom_call.1} parent=1 // loop_footer_branch
      %17 = sbr.rel target = $region3
    $region8: #{tpu_custom_call.1} parent=1 // loop_exit
      _
    %413 = vsyncpa [#allocation3], 1
    %s414 = scalar_lea.sflag [#allocation3], 1
    %415 = vsyncpa %s414, 1
    %416 = vsyncpa [#allocation6], 1
    %s417 = scalar_lea.sflag [#allocation6], 1
    %418 = vsyncpa %s417, 1
    %419 = vsyncpa [#allocation4], 1
    %s420 = scalar_lea.sflag [#allocation4], 1
    %421 = vsyncpa %s420, 1

</llo_original>
